<compile_context>
chip_gen: v5e
topology: v5e:2x2
jax: 0.10.0
libtpu: 0.0.40
codegen_flags: <defaults>
</compile_context>

<pallas_src>
import functools

import jax
import jax.numpy as jnp
from jax.experimental import pallas as pl
from jax.experimental.pallas import tpu as pltpu

IN_FEATURES = 5
OUT_FEATURES = 3


def _round_up(n, m):
    return ((n + m - 1) // m) * m


def linear_kernel(w_ref, b_ref, x_ref, o_ref):
    """w_ref: (3,5) f32 SMEM, b_ref: (3,) f32 SMEM,
    x_ref: (5, TILE_B) f32 VMEM, o_ref: (3, TILE_B) f32 VMEM."""
    x = x_ref[...]                                # (IN_FEATURES, TILE_B), one load
    tb = x.shape[1]
    rows = []
    for o in range(OUT_FEATURES):                 # static unroll: 3 output rows
        acc = jnp.full((1, tb), b_ref[o], dtype=jnp.float32)   # bias-initialized acc
        for i in range(IN_FEATURES):              # static unroll: 5 VPU FMAs / row
            acc = acc + w_ref[o, i] * x[i:i + 1, :]
        rows.append(acc)
    o_ref[...] = jnp.concatenate(rows, axis=0).astype(o_ref.dtype)  # one dense store


@functools.partial(jax.jit, static_argnames=("tile_b",))
def linear_forward_pallas(x, w, b, *, tile_b=2048):
    """x: (B, 5), w: (3, 5), b: (3,)  ->  (B, 3). Batch-tiled, lane-dense kernel."""
    B = x.shape[0]
    tile_b = min(tile_b, _round_up(B, 128))       # lane dim must be a multiple of 128
    Bp = _round_up(B, tile_b)

    x_t = x.T                                     # (IN_FEATURES, B): batch in lanes
    if Bp != B:
        x_t = jnp.pad(x_t, ((0, 0), (0, Bp - B)))

    out_t = pl.pallas_call(
        linear_kernel,
        out_shape=jax.ShapeDtypeStruct((OUT_FEATURES, Bp), x.dtype),
        grid_spec=pltpu.PrefetchScalarGridSpec(
            num_scalar_prefetch=0,
            grid=(Bp // tile_b,),
            in_specs=[
                pl.BlockSpec(memory_space=pltpu.MemorySpace.SMEM),      # w (3, 5)
                pl.BlockSpec(memory_space=pltpu.MemorySpace.SMEM),      # b (3,)
                pl.BlockSpec((IN_FEATURES, tile_b), lambda i: (0, i)),  # x tile
            ],
            out_specs=pl.BlockSpec((OUT_FEATURES, tile_b), lambda i: (0, i)),
        ),
        compiler_params=pltpu.CompilerParams(
            dimension_semantics=("parallel",),    # batch tiles are independent
        ),
    )(w, b, x_t)

    return out_t[:, :B].T                         # back to (B, OUT_FEATURES)


def linear_forward(x, w, b, *, tile_b=2048, min_pallas_batch=256):
    """Dispatch: tiny batches are dominated by kernel-launch overhead, so let
    XLA's fused dot handle them; large batches use the Pallas kernel."""
    if x.shape[0] < min_pallas_batch:
        return x @ w.T + b
    return linear_forward_pallas(x, w, b, tile_b=tile_b)


def init_params(key):
    # Mirror PyTorch nn.Linear default init: U(-1/sqrt(fan_in), 1/sqrt(fan_in)).
    kw, kb = jax.random.split(key)
    bound = 1.0 / (IN_FEATURES ** 0.5)
    w = jax.random.uniform(kw, (OUT_FEATURES, IN_FEATURES), jnp.float32,
                           minval=-bound, maxval=bound)
    b = jax.random.uniform(kb, (OUT_FEATURES,), jnp.float32,
                           minval=-bound, maxval=bound)
    return w, b


if __name__ == "__main__":
    key = jax.random.PRNGKey(0)
    k_param, k_x = jax.random.split(key)

    w, b = init_params(k_param)                   # w: (3, 5), b: (3,) as in torch
    batch = 500                                   # ragged on purpose: exercises pad path
    x = jax.random.normal(k_x, (batch, IN_FEATURES), jnp.float32)

    # Drive the Pallas path directly; tile_b=256 -> padded to 512 lanes and a
    # 2-step "parallel" grid (pipelining + megacore sharding both exercised).
    out = linear_forward_pallas(x, w, b, tile_b=256)
    out = jax.block_until_ready(out)

    ref = x @ w.T + b                             # same math as torch's nn.Linear
    assert out.shape == (batch, OUT_FEATURES)
    assert jnp.allclose(out, ref, atol=1e-5, rtol=1e-5), \
        float(jnp.max(jnp.abs(out - ref)))

    print("KERNEL_OK")
</pallas_src>

<mosaic_0001>
module attributes {stable_mosaic.version = 11 : i64} {
  func.func @linear_kernel(%arg0: i32, %arg1: memref<3x5xf32, #tpu.memory_space<smem>>, %arg2: memref<3xf32, #tpu.memory_space<smem>>, %arg3: memref<5x256xf32, #tpu.memory_space<vmem>>, %arg4: memref<3x256xf32, #tpu.memory_space<vmem>>) attributes {dimension_semantics = [#tpu.dimension_semantics<parallel>], iteration_bounds = array<i64: 2>, scalar_prefetch = 0 : i64, scratch_operands = 0 : i64, tpu.core_type = #tpu.core_type<tc>, window_params = [{transform_indices = @transform_0, window_bounds = array<i64: 3, 5>}, {transform_indices = @transform_1, window_bounds = array<i64: 3>}, {transform_indices = @transform_2, window_bounds = array<i64: 5, 256>}, {transform_indices = @transform_3, window_bounds = array<i64: 3, 256>}]} {
    %c0 = arith.constant 0 : index
    %c0_0 = arith.constant 0 : index
    %0 = vector.load %arg3[%c0, %c0_0] : memref<5x256xf32, #tpu.memory_space<vmem>>, vector<5x256xf32>
    %c0_1 = arith.constant 0 : index
    %1 = memref.load %arg2[%c0_1] : memref<3xf32, #tpu.memory_space<smem>>
    %2 = vector.broadcast %1 : f32 to vector<1x256xf32>
    %c0_2 = arith.constant 0 : index
    %c0_3 = arith.constant 0 : index
    %3 = memref.load %arg1[%c0_2, %c0_3] : memref<3x5xf32, #tpu.memory_space<smem>>
    %4 = vector.extract_strided_slice %0 {offsets = [0, 0], sizes = [1, 256], strides = [1, 1]} : vector<5x256xf32> to vector<1x256xf32>
    %5 = vector.broadcast %3 : f32 to vector<1x256xf32>
    %6 = arith.mulf %5, %4 : vector<1x256xf32>
    %7 = arith.addf %2, %6 : vector<1x256xf32>
    %c0_4 = arith.constant 0 : index
    %c1 = arith.constant 1 : index
    %8 = memref.load %arg1[%c0_4, %c1] : memref<3x5xf32, #tpu.memory_space<smem>>
    %9 = vector.extract_strided_slice %0 {offsets = [1, 0], sizes = [1, 256], strides = [1, 1]} : vector<5x256xf32> to vector<1x256xf32>
    %10 = vector.broadcast %8 : f32 to vector<1x256xf32>
    %11 = arith.mulf %10, %9 : vector<1x256xf32>
    %12 = arith.addf %7, %11 : vector<1x256xf32>
    %c0_5 = arith.constant 0 : index
    %c2 = arith.constant 2 : index
    %13 = memref.load %arg1[%c0_5, %c2] : memref<3x5xf32, #tpu.memory_space<smem>>
    %14 = vector.extract_strided_slice %0 {offsets = [2, 0], sizes = [1, 256], strides = [1, 1]} : vector<5x256xf32> to vector<1x256xf32>
    %15 = vector.broadcast %13 : f32 to vector<1x256xf32>
    %16 = arith.mulf %15, %14 : vector<1x256xf32>
    %17 = arith.addf %12, %16 : vector<1x256xf32>
    %c0_6 = arith.constant 0 : index
    %c3 = arith.constant 3 : index
    %18 = memref.load %arg1[%c0_6, %c3] : memref<3x5xf32, #tpu.memory_space<smem>>
    %19 = vector.extract_strided_slice %0 {offsets = [3, 0], sizes = [1, 256], strides = [1, 1]} : vector<5x256xf32> to vector<1x256xf32>
    %20 = vector.broadcast %18 : f32 to vector<1x256xf32>
    %21 = arith.mulf %20, %19 : vector<1x256xf32>
    %22 = arith.addf %17, %21 : vector<1x256xf32>
    %c0_7 = arith.constant 0 : index
    %c4 = arith.constant 4 : index
    %23 = memref.load %arg1[%c0_7, %c4] : memref<3x5xf32, #tpu.memory_space<smem>>
    %24 = vector.extract_strided_slice %0 {offsets = [4, 0], sizes = [1, 256], strides = [1, 1]} : vector<5x256xf32> to vector<1x256xf32>
    %25 = vector.broadcast %23 : f32 to vector<1x256xf32>
    %26 = arith.mulf %25, %24 : vector<1x256xf32>
    %27 = arith.addf %22, %26 : vector<1x256xf32>
    %c1_8 = arith.constant 1 : index
    %28 = memref.load %arg2[%c1_8] : memref<3xf32, #tpu.memory_space<smem>>
    %29 = vector.broadcast %28 : f32 to vector<1x256xf32>
    %c1_9 = arith.constant 1 : index
    %c0_10 = arith.constant 0 : index
    %30 = memref.load %arg1[%c1_9, %c0_10] : memref<3x5xf32, #tpu.memory_space<smem>>
    %31 = vector.extract_strided_slice %0 {offsets = [0, 0], sizes = [1, 256], strides = [1, 1]} : vector<5x256xf32> to vector<1x256xf32>
    %32 = vector.broadcast %30 : f32 to vector<1x256xf32>
    %33 = arith.mulf %32, %31 : vector<1x256xf32>
    %34 = arith.addf %29, %33 : vector<1x256xf32>
    %c1_11 = arith.constant 1 : index
    %c1_12 = arith.constant 1 : index
    %35 = memref.load %arg1[%c1_11, %c1_12] : memref<3x5xf32, #tpu.memory_space<smem>>
    %36 = vector.extract_strided_slice %0 {offsets = [1, 0], sizes = [1, 256], strides = [1, 1]} : vector<5x256xf32> to vector<1x256xf32>
    %37 = vector.broadcast %35 : f32 to vector<1x256xf32>
    %38 = arith.mulf %37, %36 : vector<1x256xf32>
    %39 = arith.addf %34, %38 : vector<1x256xf32>
    %c1_13 = arith.constant 1 : index
    %c2_14 = arith.constant 2 : index
    %40 = memref.load %arg1[%c1_13, %c2_14] : memref<3x5xf32, #tpu.memory_space<smem>>
    %41 = vector.extract_strided_slice %0 {offsets = [2, 0], sizes = [1, 256], strides = [1, 1]} : vector<5x256xf32> to vector<1x256xf32>
    %42 = vector.broadcast %40 : f32 to vector<1x256xf32>
    %43 = arith.mulf %42, %41 : vector<1x256xf32>
    %44 = arith.addf %39, %43 : vector<1x256xf32>
    %c1_15 = arith.constant 1 : index
    %c3_16 = arith.constant 3 : index
    %45 = memref.load %arg1[%c1_15, %c3_16] : memref<3x5xf32, #tpu.memory_space<smem>>
    %46 = vector.extract_strided_slice %0 {offsets = [3, 0], sizes = [1, 256], strides = [1, 1]} : vector<5x256xf32> to vector<1x256xf32>
    %47 = vector.broadcast %45 : f32 to vector<1x256xf32>
    %48 = arith.mulf %47, %46 : vector<1x256xf32>
    %49 = arith.addf %44, %48 : vector<1x256xf32>
    %c1_17 = arith.constant 1 : index
    %c4_18 = arith.constant 4 : index
    %50 = memref.load %arg1[%c1_17, %c4_18] : memref<3x5xf32, #tpu.memory_space<smem>>
    %51 = vector.extract_strided_slice %0 {offsets = [4, 0], sizes = [1, 256], strides = [1, 1]} : vector<5x256xf32> to vector<1x256xf32>
    %52 = vector.broadcast %50 : f32 to vector<1x256xf32>
    %53 = arith.mulf %52, %51 : vector<1x256xf32>
    %54 = arith.addf %49, %53 : vector<1x256xf32>
    %c2_19 = arith.constant 2 : index
    %55 = memref.load %arg2[%c2_19] : memref<3xf32, #tpu.memory_space<smem>>
    %56 = vector.broadcast %55 : f32 to vector<1x256xf32>
    %c2_20 = arith.constant 2 : index
    %c0_21 = arith.constant 0 : index
    %57 = memref.load %arg1[%c2_20, %c0_21] : memref<3x5xf32, #tpu.memory_space<smem>>
    %58 = vector.extract_strided_slice %0 {offsets = [0, 0], sizes = [1, 256], strides = [1, 1]} : vector<5x256xf32> to vector<1x256xf32>
    %59 = vector.broadcast %57 : f32 to vector<1x256xf32>
    %60 = arith.mulf %59, %58 : vector<1x256xf32>
    %61 = arith.addf %56, %60 : vector<1x256xf32>
    %c2_22 = arith.constant 2 : index
    %c1_23 = arith.constant 1 : index
    %62 = memref.load %arg1[%c2_22, %c1_23] : memref<3x5xf32, #tpu.memory_space<smem>>
    %63 = vector.extract_strided_slice %0 {offsets = [1, 0], sizes = [1, 256], strides = [1, 1]} : vector<5x256xf32> to vector<1x256xf32>
    %64 = vector.broadcast %62 : f32 to vector<1x256xf32>
    %65 = arith.mulf %64, %63 : vector<1x256xf32>
    %66 = arith.addf %61, %65 : vector<1x256xf32>
    %c2_24 = arith.constant 2 : index
    %c2_25 = arith.constant 2 : index
    %67 = memref.load %arg1[%c2_24, %c2_25] : memref<3x5xf32, #tpu.memory_space<smem>>
    %68 = vector.extract_strided_slice %0 {offsets = [2, 0], sizes = [1, 256], strides = [1, 1]} : vector<5x256xf32> to vector<1x256xf32>
    %69 = vector.broadcast %67 : f32 to vector<1x256xf32>
    %70 = arith.mulf %69, %68 : vector<1x256xf32>
    %71 = arith.addf %66, %70 : vector<1x256xf32>
    %c2_26 = arith.constant 2 : index
    %c3_27 = arith.constant 3 : index
    %72 = memref.load %arg1[%c2_26, %c3_27] : memref<3x5xf32, #tpu.memory_space<smem>>
    %73 = vector.extract_strided_slice %0 {offsets = [3, 0], sizes = [1, 256], strides = [1, 1]} : vector<5x256xf32> to vector<1x256xf32>
    %74 = vector.broadcast %72 : f32 to vector<1x256xf32>
    %75 = arith.mulf %74, %73 : vector<1x256xf32>
    %76 = arith.addf %71, %75 : vector<1x256xf32>
    %c2_28 = arith.constant 2 : index
    %c4_29 = arith.constant 4 : index
    %77 = memref.load %arg1[%c2_28, %c4_29] : memref<3x5xf32, #tpu.memory_space<smem>>
    %78 = vector.extract_strided_slice %0 {offsets = [4, 0], sizes = [1, 256], strides = [1, 1]} : vector<5x256xf32> to vector<1x256xf32>
    %79 = vector.broadcast %77 : f32 to vector<1x256xf32>
    %80 = arith.mulf %79, %78 : vector<1x256xf32>
    %81 = arith.addf %76, %80 : vector<1x256xf32>
    %82 = tpu.concatenate %27, %54, %81 in 0 : vector<1x256xf32>, vector<1x256xf32>, vector<1x256xf32> -> vector<3x256xf32>
    %c0_30 = arith.constant 0 : index
    %c0_31 = arith.constant 0 : index
    %83 = vector.load %arg4[%c0_30, %c0_31] : memref<3x256xf32, #tpu.memory_space<vmem>>, vector<3x256xf32>
    tpu.vector_store %arg4[%c0_30, %c0_31], %82 {strides = array<i32>} : memref<3x256xf32, #tpu.memory_space<vmem>>, vector<3x256xf32>,
    return
  }
  func.func @transform_0(%arg0: i32) -> (i32, i32) {
    %c0_i32 = arith.constant 0 : i32
    %c0_i32_0 = arith.constant 0 : i32
    %c0_i32_1 = arith.constant 0 : i32
    return %c0_i32, %c0_i32_0 : i32, i32
  }
  func.func @transform_1(%arg0: i32) -> i32 {
    %c0_i32 = arith.constant 0 : i32
    %c0_i32_0 = arith.constant 0 : i32
    return %c0_i32 : i32
  }
  func.func @transform_2(%arg0: i32) -> (i32, i32) {
    %c0_i32 = arith.constant 0 : i32
    %c0_i32_0 = arith.constant 0 : i32
    return %c0_i32, %arg0 : i32, i32
  }
  func.func @transform_3(%arg0: i32) -> (i32, i32) {
    %c0_i32 = arith.constant 0 : i32
    %c0_i32_0 = arith.constant 0 : i32
    return %c0_i32, %arg0 : i32, i32
  }
}

</mosaic_0001>

<llo_original>
// kernel: linear_forward_pallas.1
$region0: #{linear_forward_pallas.1}
  #allocation0 [shape = 'u32[]', space=smem, size = 0x4, offset = 0x4, fixed_abs, tag = 'smem constant byte address 0x4 - core index']
  #allocation1 [shape = 'u32[72,128]{1,0:T(1,128)}', space=vmem, size = 0x9000, scoped, tag = 'internal scratch']
  %s0 = inlined_call_operand.vmem [shape: f32[3,5], index: 0, kind: input, shape index: {}]
  %s1 = inlined_call_operand.vmem [shape: f32[3], index: 1, kind: input, shape index: {}]
  %s2 = inlined_call_operand.vmem [shape: f32[5,512], index: 2, kind: input, shape index: {}]
  %s3 = inlined_call_operand.vmem [shape: f32[3,512], index: 3, kind: output, shape index: {}]
  %s4 = sld [smem:[#allocation0]]
  $region53: #{linear_forward_pallas.1} parent=0
    _
  %s6 = ssub.s32 1, %s4
  %s7 = scalar_select 0, %s6, %s4
  $region1: #{linear_forward_pallas.1} parent=0
    #allocation2 [shape = 'u8[2048]{0}', space=smem, size = 0x800, scoped, tag = 'input window, operand 0, single buffered']
    #allocation3 [shape = 's32[2]{0}', space=sflag, size = 0x8, scoped, tag = 'scoped memory for linear_forward_pallas.1']
    #allocation4 [shape = 'u8[512]{0}', space=smem, size = 0x200, scoped, tag = 'input window, operand 1, single buffered']
    #allocation5 [shape = 's32[1]{0}', space=sflag, size = 0x4, scoped, tag = 'scoped memory for linear_forward_pallas.1']
    %8 = vsyncpa [#allocation3], 0
    %9 = vsyncpa [#allocation5], 0
    loop: start=0, step=1, limit=4
    $region2: #{linear_forward_pallas.1} parent=1 // loop_pre_header
      _
    $region3: #{linear_forward_pallas.1} parent=1 // loop_header
      %s11 = sphi 0, %s15
      %p12 = scmp.ge.s32.totalorder %s11, 4
      %s19 = sphi 0, %s19
      %s21 = sphi 0, %s19
      %s22 = sphi 0, %s21
      %s36 = sphi 0, %s22
      %s40 = sphi 0, %s40
      %s42 = sphi 0, %s40
      %s43 = sphi 0, %s42
      %s57 = sphi 0, %s43
      %s63 = sphi 0, %s65
      %s66 = sphi 0, %s63
      %s67 = sphi 0, %s66
      %s83 = sphi 0, %s67
      %s89 = sphi 0, %s91
      %s92 = sphi 0, %s89
      %s93 = sphi 0, %s92
      %s109 = sphi 0, %s93
    $region4: #{linear_forward_pallas.1} parent=1 // loop_header_branch
      %14 = sbr.rel (%p12) target = $region8
    $region5: #{linear_forward_pallas.1} parent=1 // loop_body
      %s16 = ssub.s32 %s11, 1
      %s17 = ssub.s32 %s11, 2
      %s18 = sadd.s32 %s11, 1
      %s20 = sadd.s32 %s19, 1
      %p23 = scmp.eq.s32.totalorder %s11, 1
      %p24 = scmp.ne.s32.totalorder %s19, %s21
      %p25 = scmp.eq.s32.totalorder %s11, 0
      %p26 = por %p24, %p25
      %p27 = scmp.ne.s32.totalorder %s19, %s21
      %p28 = scmp.eq.s32.totalorder %s16, 1
      %p29 = por %p27, %p28
      %p30 = scmp.ne.s32.totalorder %s21, %s22
      %p31 = scmp.eq.s32.totalorder %s16, 0
      %p32 = por %p30, %p31
      %p33 = scmp.ne.s32.totalorder %s21, %s22
      %p34 = scmp.eq.s32.totalorder %s17, 1
      %p35 = por %p33, %p34
      %p37 = scmp.ne.s32.totalorder %s22, %s36
      %p38 = scmp.eq.s32.totalorder %s17, 0
      %p39 = por %p37, %p38
      %s41 = sadd.s32 %s40, 1
      %p44 = scmp.eq.s32.totalorder %s11, 1
      %p45 = scmp.ne.s32.totalorder %s40, %s42
      %p46 = scmp.eq.s32.totalorder %s11, 0
      %p47 = por %p45, %p46
      %p48 = scmp.ne.s32.totalorder %s40, %s42
      %p49 = scmp.eq.s32.totalorder %s16, 1
      %p50 = por %p48, %p49
      %p51 = scmp.ne.s32.totalorder %s42, %s43
      %p52 = scmp.eq.s32.totalorder %s16, 0
      %p53 = por %p51, %p52
      %p54 = scmp.ne.s32.totalorder %s42, %s43
      %p55 = scmp.eq.s32.totalorder %s17, 1
      %p56 = por %p54, %p55
      %p58 = scmp.ne.s32.totalorder %s43, %s57
      %p59 = scmp.eq.s32.totalorder %s17, 0
      %p60 = por %p58, %p59
      %s61 = ssub.s32 %s11, %s18
      %p62 = scmp.eq.s32.totalorder %s61, 0
      %s64 = sadd.s32 %s63, 1
      %s65 = scalar_select %p62, %s63, %s64
      %p68 = pneg %p62
      %p69 = scmp.eq.s32.totalorder %s11, 1
      %p70 = por %p68, %p69
      %p71 = scmp.ne.s32.totalorder %s63, %s66
      %p72 = scmp.eq.s32.totalorder %s11, 0
      %p73 = por %p71, %p72
      %p74 = scmp.ne.s32.totalorder %s63, %s66
      %p75 = scmp.eq.s32.totalorder %s16, 1
      %p76 = por %p74, %p75
      %p77 = scmp.ne.s32.totalorder %s66, %s67
      %p78 = scmp.eq.s32.totalorder %s16, 0
      %p79 = por %p77, %p78
      %p80 = scmp.ne.s32.totalorder %s66, %s67
      %p81 = scmp.eq.s32.totalorder %s17, 1
      %p82 = por %p80, %p81
      %p84 = scmp.ne.s32.totalorder %s67, %s83
      %p85 = scmp.eq.s32.totalorder %s17, 0
      %p86 = por %p84, %p85
      %s87 = ssub.s32 %s11, %s18
      %p88 = scmp.eq.s32.totalorder %s87, 0
      %s90 = sadd.s32 %s89, 1
      %s91 = scalar_select %p88, %s89, %s90
      %p94 = pneg %p88
      %p95 = scmp.eq.s32.totalorder %s11, 1
      %p96 = por %p94, %p95
      %p97 = scmp.ne.s32.totalorder %s89, %s92
      %p98 = scmp.eq.s32.totalorder %s11, 0
      %p99 = por %p97, %p98
      %p100 = scmp.ne.s32.totalorder %s89, %s92
      %p101 = scmp.eq.s32.totalorder %s16, 1
      %p102 = por %p100, %p101
      %p103 = scmp.ne.s32.totalorder %s92, %s93
      %p104 = scmp.eq.s32.totalorder %s16, 0
      %p105 = por %p103, %p104
      %p106 = scmp.ne.s32.totalorder %s92, %s93
      %p107 = scmp.eq.s32.totalorder %s17, 1
      %p108 = por %p106, %p107
      %p110 = scmp.ne.s32.totalorder %s93, %s109
      %p111 = scmp.eq.s32.totalorder %s17, 0
      %p112 = por %p110, %p111
      %p113 = scmp.le.s32.totalorder 1, %s11
      %p114 = scmp.lt.s32.totalorder %s11, 3
      %p115 = pnand %p113, %p114
      %p116 = pneg %p115
      // Predicated region
      $region9: #{linear_forward_pallas.1} parent=5 // pred_check
        _
      $region10: #{linear_forward_pallas.1} parent=5 // pred_check_branch
        %118 = sbr.rel (%p115) target = $region12
      $region11: #{linear_forward_pallas.1} parent=5 // pred_region
        %s119 = ssub.s32 %s11, 1
        // Predicated region
        $region13: #{linear_forward_pallas.1} parent=11 // pred_check
          %p120 = pneg %p32
        $region14: #{linear_forward_pallas.1} parent=11 // pred_check_branch
          %122 = sbr.rel (%p120) target = $region16
        $region15: #{linear_forward_pallas.1} parent=11 // pred_region
          %124 = vsyncadd [#allocation3], 0
          %s126 = sshll.u32 %s0, 4
          %s127 = int_to_ptr.vmem [resolvable:$true] %s126
          %129 = dma.vmem_to_smem %s127, 64, [#allocation2], [#allocation3]
        $region16: #{linear_forward_pallas.1} parent=11 // pred_fallthru
          _
        // Predicated region
        $region17: #{linear_forward_pallas.1} parent=11 // pred_check
          %p130 = pneg %p53
        $region18: #{linear_forward_pallas.1} parent=11 // pred_check_branch
          %132 = sbr.rel (%p130) target = $region20
        $region19: #{linear_forward_pallas.1} parent=11 // pred_region
          %134 = vsyncadd [#allocation5], 0
          %s136 = sshll.u32 %s1, 4
          %s137 = int_to_ptr.vmem [resolvable:$true] %s136
          %139 = dma.vmem_to_smem %s137, 16, [#allocation4], [#allocation5]
        $region20: #{linear_forward_pallas.1} parent=11 // pred_fallthru
          _
      $region12: #{linear_forward_pallas.1} parent=5 // pred_fallthru
        _
      %p140 = scmp.lt.s32.totalorder %s11, 2
      // Predicated region
      $region21: #{linear_forward_pallas.1} parent=5 // pred_check
        %p141 = pneg %p140
      $region22: #{linear_forward_pallas.1} parent=5 // pred_check_branch
        %143 = sbr.rel (%p141) target = $region24
      $region23: #{linear_forward_pallas.1} parent=5 // pred_region
        // Predicated region
        $region25: #{linear_forward_pallas.1} parent=23 // pred_check
          %p144 = pneg %p73
        $region26: #{linear_forward_pallas.1} parent=23 // pred_check_branch
          %146 = sbr.rel (%p144) target = $region28
        $region27: #{linear_forward_pallas.1} parent=23 // pred_region
          %s147 = smul.u32 2, %s11
          %p148 = scmp.lt.s32.totalorder %s147, 3
          %s149 = scalar_select %p148, %s147, 3
          %s150 = smul.addr %s149, 8
          %s151 = scalar_lea.vmem %s2, %s150
          %s152 = smul.u32 2, %s11
        $region28: #{linear_forward_pallas.1} parent=23 // pred_fallthru
          _
      $region24: #{linear_forward_pallas.1} parent=5 // pred_fallthru
        _
      %p153 = scmp.le.s32.totalorder 1, %s11
      %p154 = scmp.lt.s32.totalorder %s11, 3
      %p155 = pnand %p153, %p154
      %p156 = pneg %p155
      // Predicated region
      $region29: #{linear_forward_pallas.1} parent=5 // pred_check
        _
      $region30: #{linear_forward_pallas.1} parent=5 // pred_check_branch
        %158 = sbr.rel (%p155) target = $region32
      $region31: #{linear_forward_pallas.1} parent=5 // pred_region
        %s159 = ssub.s32 %s11, 1
        // Predicated region
        $region33: #{linear_forward_pallas.1} parent=31 // pred_check
          %p160 = pneg %p32
        $region34: #{linear_forward_pallas.1} parent=31 // pred_check_branch
          %162 = sbr.rel (%p160) target = $region36
        $region35: #{linear_forward_pallas.1} parent=31 // pred_region
          %164 = dma.done [#allocation3], 64
        $region36: #{linear_forward_pallas.1} parent=31 // pred_fallthru
          _
        // Predicated region
        $region37: #{linear_forward_pallas.1} parent=31 // pred_check
          %p165 = pneg %p53
        $region38: #{linear_forward_pallas.1} parent=31 // pred_check_branch
          %167 = sbr.rel (%p165) target = $region40
        $region39: #{linear_forward_pallas.1} parent=31 // pred_region
          %169 = dma.done [#allocation5], 16
        $region40: #{linear_forward_pallas.1} parent=31 // pred_fallthru
          _
        %170 = sfence
        %p171 = pneg %p32
        %p172 = pneg %p29
        %p173 = pneg %p53
        %p174 = pneg %p50
        %s175 = smul.u32 2, %s16
        %p176 = scmp.lt.s32.totalorder %s175, 3
        %s177 = scalar_select %p176, %s175, 3
        %s178 = smul.addr %s177, 8
        %s179 = scalar_lea.vmem %s2, %s178
        %p180 = pneg %p79
        %p181 = pneg %p76
        %p182 = pneg %p105
        %p183 = pneg %p102
        %s184 = smul.u32 2, %s16
        %p185 = scmp.lt.s32.totalorder %s184, 3
        %s186 = scalar_select %p185, %s184, 3
        %s187 = smul.addr %s186, 4
        %s188 = scalar_lea.vmem %s3, %s187
        %s189 = smul.u32 2, %s16
        %p190 = scmp.lt.s32.totalorder %s189, 3
        %s191 = scalar_select %p190, %s189, 3
        %s192 = smul.addr %s191, 8
        %s193 = scalar_lea.vmem %s2, %s192
        %s194 = smul.u32 2, %s16
        %s195 = smul.u32 2, %s16
        %p196 = scmp.lt.s32.totalorder %s195, 3
        %s197 = scalar_select %p196, %s195, 3
        %s198 = smul.addr %s197, 4
        %s199 = scalar_lea.vmem %s3, %s198
        %s200 = smul.u32 2, %s16
        %v201 = vld [vmem:[%s193] sm:$0x1f]
        %v202 = vld [vmem:[%s193 + $0x8] sm:$0x1f]
        %s203 = sld [smem:[#allocation4]]
        %v204 = vstv %s203
        %s205 = sld [smem:[#allocation2]]
        %v206 = vstv %s205
        %v207 = vmul.f32 %v206, %v201
        %v208 = vmul.f32 %v206, %v202
        %v209 = vadd.f32 %v204, %v207
        %v210 = vadd.f32 %v204, %v208
        %s211 = sld [smem:[#allocation2 + $0x1]]
        %v212 = vstv %s211
        %v213 = vmul.f32 %v212, %v201
        %v214 = vmul.f32 %v212, %v202
        %v217 = vrot.slane %v213, 1
        %v218 = vrot.slane %v214, 1
        %v221 = vadd.f32 %v209, %v217
        %v222 = vadd.f32 %v210, %v218
        %s223 = sld [smem:[#allocation2 + $0x2]]
        %v224 = vstv %s223
        %v225 = vmul.f32 %v224, %v201
        %v226 = vmul.f32 %v224, %v202
        %v229 = vrot.slane %v225, 2
        %v230 = vrot.slane %v226, 2
        %v233 = vadd.f32 %v221, %v229
        %v234 = vadd.f32 %v222, %v230
        %s235 = sld [smem:[#allocation2 + $0x3]]
        %v236 = vstv %s235
        %v237 = vmul.f32 %v236, %v201
        %v238 = vmul.f32 %v236, %v202
        %v241 = vrot.slane %v237, 3
        %v242 = vrot.slane %v238, 3
        %v245 = vadd.f32 %v233, %v241
        %v246 = vadd.f32 %v234, %v242
        %s247 = sld [smem:[#allocation2 + $0x4]]
        %v248 = vstv %s247
        %v249 = vmul.f32 %v248, %v201
        %v250 = vmul.f32 %v248, %v202
        %v253 = vrot.slane %v249, 4
        %v254 = vrot.slane %v250, 4
        %v257 = vadd.f32 %v245, %v253
        %v258 = vadd.f32 %v246, %v254
        %s259 = sld [smem:[#allocation4 + $0x1]]
        %v260 = vstv %s259
        %s261 = sld [smem:[#allocation2 + $0x80]]
        %v262 = vstv %s261
        %v263 = vmul.f32 %v262, %v201
        %v264 = vmul.f32 %v262, %v202
        %v265 = vadd.f32 %v260, %v263
        %v266 = vadd.f32 %v260, %v264
        %s267 = sld [smem:[#allocation2 + $0x81]]
        %v268 = vstv %s267
        %v269 = vmul.f32 %v268, %v201
        %v270 = vmul.f32 %v268, %v202
        %v273 = vrot.slane %v269, 1
        %v274 = vrot.slane %v270, 1
        %v277 = vadd.f32 %v265, %v273
        %v278 = vadd.f32 %v266, %v274
        %s279 = sld [smem:[#allocation2 + $0x82]]
        %v280 = vstv %s279
        %v281 = vmul.f32 %v280, %v201
        %v282 = vmul.f32 %v280, %v202
        %v285 = vrot.slane %v281, 2
        %v286 = vrot.slane %v282, 2
        %v289 = vadd.f32 %v277, %v285
        %v290 = vadd.f32 %v278, %v286
        %s291 = sld [smem:[#allocation2 + $0x83]]
        %v292 = vstv %s291
        %v293 = vmul.f32 %v292, %v201
        %v294 = vmul.f32 %v292, %v202
        %v297 = vrot.slane %v293, 3
        %v298 = vrot.slane %v294, 3
        %v301 = vadd.f32 %v289, %v297
        %v302 = vadd.f32 %v290, %v298
        %s303 = sld [smem:[#allocation2 + $0x84]]
        %v304 = vstv %s303
        %v305 = vmul.f32 %v304, %v201
        %v306 = vmul.f32 %v304, %v202
        %v309 = vrot.slane %v305, 4
        %v310 = vrot.slane %v306, 4
        %v313 = vadd.f32 %v301, %v309
        %v314 = vadd.f32 %v302, %v310
        %s315 = sld [smem:[#allocation4 + $0x2]]
        %v316 = vstv %s315
        %s317 = sld [smem:[#allocation2 + $0x100]]
        %v318 = vstv %s317
        %v319 = vmul.f32 %v318, %v201
        %v320 = vmul.f32 %v318, %v202
        %v321 = vadd.f32 %v316, %v319
        %v322 = vadd.f32 %v316, %v320
        %s323 = sld [smem:[#allocation2 + $0x101]]
        %v324 = vstv %s323
        %v325 = vmul.f32 %v324, %v201
        %v326 = vmul.f32 %v324, %v202
        %v329 = vrot.slane %v325, 1
        %v330 = vrot.slane %v326, 1
        %v333 = vadd.f32 %v321, %v329
        %v334 = vadd.f32 %v322, %v330
        %s335 = sld [smem:[#allocation2 + $0x102]]
        %v336 = vstv %s335
        %v337 = vmul.f32 %v336, %v201
        %v338 = vmul.f32 %v336, %v202
        %v341 = vrot.slane %v337, 2
        %v342 = vrot.slane %v338, 2
        %v345 = vadd.f32 %v333, %v341
        %v346 = vadd.f32 %v334, %v342
        %s347 = sld [smem:[#allocation2 + $0x103]]
        %v348 = vstv %s347
        %v349 = vmul.f32 %v348, %v201
        %v350 = vmul.f32 %v348, %v202
        %v353 = vrot.slane %v349, 3
        %v354 = vrot.slane %v350, 3
        %v357 = vadd.f32 %v345, %v353
        %v358 = vadd.f32 %v346, %v354
        %s359 = sld [smem:[#allocation2 + $0x104]]
        %v360 = vstv %s359
        %v361 = vmul.f32 %v360, %v201
        %v362 = vmul.f32 %v360, %v202
        %v365 = vrot.slane %v361, 4
        %v366 = vrot.slane %v362, 4
        %v369 = vadd.f32 %v357, %v365
        %v370 = vadd.f32 %v358, %v366
        %v373 = vrot.slane %v313, 7
        %v374 = vrot.slane %v314, 7
        %v379 = vrot.slane %v369, 6
        %v380 = vrot.slane %v370, 6
        %vm383 = vcmask 1040384
        %v384 = vsel %vm383, %v257, %v373
        %v385 = vsel %vm383, %v258, %v374
        %vm386 = vcmask 1041408
        %v387 = vsel %vm386, %v384, %v379
        %v388 = vsel %vm386, %v385, %v380
        %v391 = vrot.slane %v388, 4
        %vm392 = vcmask 1043456
        %v393 = vsel %vm392, %v387, %v391
        %395 = vst [vmem:[%s199] sm:$0x77] %v393
        %s396 = smul.u32 2, %s16
        %p397 = scmp.lt.s32.totalorder %s396, 3
        %s398 = scalar_select %p397, %s396, 3
        %s399 = smul.addr %s398, 4
        %s400 = scalar_lea.vmem %s3, %s399
        // Predicated region
        $region41: #{linear_forward_pallas.1} parent=31 // pred_check
          %p401 = pneg %p102
        $region42: #{linear_forward_pallas.1} parent=31 // pred_check_branch
          %403 = sbr.rel (%p401) target = $region44
        $region43: #{linear_forward_pallas.1} parent=31 // pred_region
          %s404 = smul.u32 2, %s16
        $region44: #{linear_forward_pallas.1} parent=31 // pred_fallthru
          _
      $region32: #{linear_forward_pallas.1} parent=5 // pred_fallthru
        _
      %p405 = scmp.le.s32.totalorder 2, %s11
      // Predicated region
      $region45: #{linear_forward_pallas.1} parent=5 // pred_check
        %p406 = pneg %p405
      $region46: #{linear_forward_pallas.1} parent=5 // pred_check_branch
        %408 = sbr.rel (%p406) target = $region48
      $region47: #{linear_forward_pallas.1} parent=5 // pred_region
        %s409 = ssub.s32 %s11, 2
        // Predicated region
        $region49: #{linear_forward_pallas.1} parent=47 // pred_check
          %p410 = pneg %p108
        $region50: #{linear_forward_pallas.1} parent=47 // pred_check_branch
          %412 = sbr.rel (%p410) target = $region52
        $region51: #{linear_forward_pallas.1} parent=47 // pred_region
          %s413 = smul.u32 2, %s17
          %p414 = scmp.lt.s32.totalorder %s413, 3
          %s415 = scalar_select %p414, %s413, 3
          %s416 = smul.addr %s415, 4
          %s417 = scalar_lea.vmem %s3, %s416
        $region52: #{linear_forward_pallas.1} parent=47 // pred_fallthru
          _
      $region48: #{linear_forward_pallas.1} parent=5 // pred_fallthru
        _
    $region6: #{linear_forward_pallas.1} parent=1 // loop_footer
      %s15 = sadd.s32 1, %s11
    $region7: #{linear_forward_pallas.1} parent=1 // loop_footer_branch
      %10 = sbr.rel target = $region3
    $region8: #{linear_forward_pallas.1} parent=1 // loop_exit
      _
    %418 = vsyncpa [#allocation3], 1
    %s419 = scalar_lea.sflag [#allocation3], 1
    %420 = vsyncpa %s419, 1
    %421 = vsyncpa [#allocation5], 1

</llo_original>
